<compile_context>
chip_gen: v7x
topology: tpu7x:2x2x1
jax: 0.10.0
libtpu: 0.0.40
codegen_flags: <defaults>
</compile_context>

<pallas_src>
import jax
import jax.numpy as jnp
from jax.experimental import pallas as pl
from jax.experimental.pallas import tpu as pltpu

LANE = 128      # lane width for the (internal) hidden activations
TB_MAX = 2048   # cap on batch-tile rows (VMEM stays < ~4 MiB double-buffered)


def mlp_kernel(x_ref, w1_ref, b1_ref, w2_ref, b2_ref, w3_ref, b3_ref, o_ref):
    # Layer 1: Linear(input -> layers_sizes[0]), no activation.
    # x arrives as raw f32 (TB, in_features); cast to bf16 for the MXU here.
    x = x_ref[...].astype(jnp.bfloat16)
    h = jnp.dot(x, w1_ref[...], preferred_element_type=jnp.float32)
    h = h + b1_ref[...]
    # Layer 2: Linear(layers_sizes[0] -> layers_sizes[1]) followed by ReLU.
    h = jnp.dot(h.astype(jnp.bfloat16), w2_ref[...],
                preferred_element_type=jnp.float32)
    h = jnp.maximum(h + b2_ref[...], 0.0)
    # Layer 3: Linear(layers_sizes[-1] -> hidden), no activation.
    # W3 has only `hidden` output columns, so only real lanes are written.
    h = jnp.dot(h.astype(jnp.bfloat16), w3_ref[...],
                preferred_element_type=jnp.float32)
    h = h + b3_ref[...]
    o_ref[...] = h.astype(o_ref.dtype)


def prepare_params(params):
    """Pad/cast weights ONCE (outside the per-call jit). W layout is (in, out).

    W1: (in,  L0) -> (in,  128) bf16   (output lanes padded; x is NOT padded)
    W2: (L0,  L1) -> (128, 128) bf16
    W3: (L1, hid) -> (128, hid) bf16   (only input rows padded -> trimmed out)
    Biases stay f32 (elementwise path in f32); b1/b2 padded to 128 lanes.
    Zero padding is exact: padded weight rows/cols and bias lanes are zero, so
    padded intermediate activations stay zero through bias-add and ReLU.
    """
    w1, b1 = params["w1"], params["b1"]
    w2, b2 = params["w2"], params["b2"]
    w3, b3 = params["w3"], params["b3"]
    w1p = jnp.pad(w1, ((0, 0), (0, LANE - w1.shape[1]))).astype(jnp.bfloat16)
    w2p = jnp.pad(w2, ((0, LANE - w2.shape[0]),
                       (0, LANE - w2.shape[1]))).astype(jnp.bfloat16)
    w3p = jnp.pad(w3, ((0, LANE - w3.shape[0]), (0, 0))).astype(jnp.bfloat16)
    b1p = jnp.pad(b1, ((0, 0), (0, LANE - b1.shape[1])))
    b2p = jnp.pad(b2, ((0, 0), (0, LANE - b2.shape[1])))
    return dict(w1=w1p, b1=b1p, w2=w2p, b2=b2p, w3=w3p, b3=b3)


def _pick_tb(batch: int) -> int:
    """Large tiles amortize per-grid-step overhead; keep >= 2 grid steps so
    v7x's two TensorCores both get work. Returns a multiple of 8 sublanes."""
    half = (batch + 1) // 2
    tb = ((half + 7) // 8) * 8
    return max(8, min(TB_MAX, tb))


@jax.jit
def fully_connected_nn(x, padded_params):
    """x: (B, input_size) f32; padded_params: output of prepare_params()."""
    w1, b1 = padded_params["w1"], padded_params["b1"]
    w2, b2 = padded_params["w2"], padded_params["b2"]
    w3, b3 = padded_params["w3"], padded_params["b3"]

    B, in_features = x.shape
    hidden = w3.shape[1]

    TB = _pick_tb(B)
    grid = (pl.cdiv(B, TB),)  # ragged last block is clipped by Pallas

    resident = lambda shape: pl.BlockSpec(shape, lambda i: (0, 0))
    flops = 2 * B * (in_features * LANE + LANE * LANE + LANE * hidden)
    bytes_accessed = (x.size * 4
                      + (w1.size + w2.size + w3.size) * 2
                      + (b1.size + b2.size + b3.size) * 4
                      + B * hidden * 4)

    return pl.pallas_call(
        mlp_kernel,
        out_shape=jax.ShapeDtypeStruct((B, hidden), jnp.float32),
        grid=grid,
        in_specs=[
            pl.BlockSpec((TB, in_features), lambda i: (i, 0)),  # raw x tile
            resident((in_features, LANE)), resident((1, LANE)),  # W1, b1
            resident((LANE, LANE)),        resident((1, LANE)),  # W2, b2
            resident((LANE, hidden)),      resident((1, hidden)),  # W3, b3
        ],
        out_specs=pl.BlockSpec((TB, hidden), lambda i: (i, 0)),
        compiler_params=pltpu.CompilerParams(
            dimension_semantics=("parallel",)),
        cost_estimate=pl.CostEstimate(
            flops=flops, transcendentals=0, bytes_accessed=bytes_accessed),
    )(x, w1, b1, w2, b2, w3, b3)


def init_linear(key, fan_in, fan_out):
    """PyTorch nn.Linear default init: U(-1/sqrt(fan_in), 1/sqrt(fan_in))."""
    kw, kb = jax.random.split(key)
    bound = 1.0 / jnp.sqrt(float(fan_in))
    w = jax.random.uniform(kw, (fan_in, fan_out), jnp.float32, -bound, bound)
    b = jax.random.uniform(kb, (1, fan_out), jnp.float32, -bound, bound)
    return w, b


if __name__ == "__main__":
    input_size = 16
    layers_sizes = [32, 64]
    hidden_size = 32
    batch = 250  # not a multiple of TB -> exercises the ragged edge block
                 # _pick_tb(250) = 128 -> grid of 2 parallel steps

    key = jax.random.PRNGKey(0)
    kx, k1, k2, k3 = jax.random.split(key, 4)

    x = jax.random.normal(kx, (batch, input_size), jnp.float32)
    w1, b1 = init_linear(k1, input_size, layers_sizes[0])
    w2, b2 = init_linear(k2, layers_sizes[0], layers_sizes[1])
    w3, b3 = init_linear(k3, layers_sizes[1], hidden_size)
    params = dict(w1=w1, b1=b1, w2=w2, b2=b2, w3=w3, b3=b3)

    padded = prepare_params(params)  # once, outside the per-call jit
    out = jax.block_until_ready(fully_connected_nn(x, padded))

    # Pure f32 reference (PyTorch semantics). The kernel feeds the MXU bf16
    # inputs with f32 accumulation, so compare with a realistic tolerance.
    h = x @ w1 + b1
    h = h @ w2 + b2
    h = jnp.maximum(h, 0.0)
    ref = h @ w3 + b3

    assert out.shape == (batch, hidden_size)
    max_err = float(jnp.max(jnp.abs(out - ref)))
    assert jnp.allclose(out, ref, atol=2e-2, rtol=2e-2), max_err

    print("KERNEL_OK")
</pallas_src>

<mosaic_0001>
module attributes {stable_mosaic.version = 11 : i64} {
  func.func @mlp_kernel(%arg0: i32, %arg1: memref<128x16xf32, #tpu.memory_space<vmem>>, %arg2: memref<16x128xbf16, #tpu.memory_space<vmem>>, %arg3: memref<1x128xf32, #tpu.memory_space<vmem>>, %arg4: memref<128x128xbf16, #tpu.memory_space<vmem>>, %arg5: memref<1x128xf32, #tpu.memory_space<vmem>>, %arg6: memref<128x32xbf16, #tpu.memory_space<vmem>>, %arg7: memref<1x32xf32, #tpu.memory_space<vmem>>, %arg8: memref<128x32xf32, #tpu.memory_space<vmem>>) attributes {dimension_semantics = [#tpu.dimension_semantics<parallel>], iteration_bounds = array<i64: 2>, scalar_prefetch = 0 : i64, scratch_operands = 0 : i64, tpu.core_type = #tpu.core_type<tc>, window_params = [{transform_indices = @transform_0, window_bounds = array<i64: 128, 16>}, {pipeline_mode = #tpu.pipeline_mode<synchronous>, transform_indices = @transform_1, window_bounds = array<i64: 16, 128>}, {pipeline_mode = #tpu.pipeline_mode<synchronous>, transform_indices = @transform_2, window_bounds = array<i64: 1, 128>}, {pipeline_mode = #tpu.pipeline_mode<synchronous>, transform_indices = @transform_3, window_bounds = array<i64: 128, 128>}, {pipeline_mode = #tpu.pipeline_mode<synchronous>, transform_indices = @transform_4, window_bounds = array<i64: 1, 128>}, {pipeline_mode = #tpu.pipeline_mode<synchronous>, transform_indices = @transform_5, window_bounds = array<i64: 128, 32>}, {pipeline_mode = #tpu.pipeline_mode<synchronous>, transform_indices = @transform_6, window_bounds = array<i64: 1, 32>}, {transform_indices = @transform_7, window_bounds = array<i64: 128, 32>}]} {
    %c0 = arith.constant 0 : index
    %c0_0 = arith.constant 0 : index
    %0 = vector.load %arg1[%c0, %c0_0] : memref<128x16xf32, #tpu.memory_space<vmem>>, vector<128x16xf32>
    %1 = arith.truncf %0 : vector<128x16xf32> to vector<128x16xbf16>
    %c0_1 = arith.constant 0 : index
    %c0_2 = arith.constant 0 : index
    %2 = vector.load %arg2[%c0_1, %c0_2] : memref<16x128xbf16, #tpu.memory_space<vmem>>, vector<16x128xbf16>
    %cst = arith.constant dense<0.000000e+00> : vector<128x128xf32>
    %3 = tpu.matmul %1, %2, %cst {dimension_numbers = #tpu.dot_dimension_numbers<[1], [0], [0], [1], [0, 0, 1, 1], [], []>} : vector<128x16xbf16>, vector<16x128xbf16>, vector<128x128xf32> -> vector<128x128xf32>
    %c0_3 = arith.constant 0 : index
    %c0_4 = arith.constant 0 : index
    %4 = vector.load %arg3[%c0_3, %c0_4] : memref<1x128xf32, #tpu.memory_space<vmem>>, vector<1x128xf32>
    %5 = vector.broadcast %4 : vector<1x128xf32> to vector<128x128xf32>
    %6 = arith.addf %3, %5 : vector<128x128xf32>
    %7 = arith.truncf %6 : vector<128x128xf32> to vector<128x128xbf16>
    %c0_5 = arith.constant 0 : index
    %c0_6 = arith.constant 0 : index
    %8 = vector.load %arg4[%c0_5, %c0_6] : memref<128x128xbf16, #tpu.memory_space<vmem>>, vector<128x128xbf16>
    %cst_7 = arith.constant dense<0.000000e+00> : vector<128x128xf32>
    %9 = tpu.matmul %7, %8, %cst_7 {dimension_numbers = #tpu.dot_dimension_numbers<[1], [0], [0], [1], [0, 0, 1, 1], [], []>} : vector<128x128xbf16>, vector<128x128xbf16>, vector<128x128xf32> -> vector<128x128xf32>
    %c0_8 = arith.constant 0 : index
    %c0_9 = arith.constant 0 : index
    %10 = vector.load %arg5[%c0_8, %c0_9] : memref<1x128xf32, #tpu.memory_space<vmem>>, vector<1x128xf32>
    %11 = vector.broadcast %10 : vector<1x128xf32> to vector<128x128xf32>
    %12 = arith.addf %9, %11 : vector<128x128xf32>
    %cst_10 = arith.constant 0.000000e+00 : f32
    %13 = vector.broadcast %cst_10 : f32 to vector<128x128xf32>
    %14 = arith.maximumf %12, %13 : vector<128x128xf32>
    %15 = arith.truncf %14 : vector<128x128xf32> to vector<128x128xbf16>
    %c0_11 = arith.constant 0 : index
    %c0_12 = arith.constant 0 : index
    %16 = vector.load %arg6[%c0_11, %c0_12] : memref<128x32xbf16, #tpu.memory_space<vmem>>, vector<128x32xbf16>
    %cst_13 = arith.constant dense<0.000000e+00> : vector<128x32xf32>
    %17 = tpu.matmul %15, %16, %cst_13 {dimension_numbers = #tpu.dot_dimension_numbers<[1], [0], [0], [1], [0, 0, 1, 1], [], []>} : vector<128x128xbf16>, vector<128x32xbf16>, vector<128x32xf32> -> vector<128x32xf32>
    %c0_14 = arith.constant 0 : index
    %c0_15 = arith.constant 0 : index
    %18 = vector.load %arg7[%c0_14, %c0_15] : memref<1x32xf32, #tpu.memory_space<vmem>>, vector<1x32xf32>
    %19 = vector.broadcast %18 : vector<1x32xf32> to vector<128x32xf32>
    %20 = arith.addf %17, %19 : vector<128x32xf32>
    %c0_16 = arith.constant 0 : index
    %c0_17 = arith.constant 0 : index
    %21 = vector.load %arg8[%c0_16, %c0_17] : memref<128x32xf32, #tpu.memory_space<vmem>>, vector<128x32xf32>
    tpu.vector_store %arg8[%c0_16, %c0_17], %20 {strides = array<i32>} : memref<128x32xf32, #tpu.memory_space<vmem>>, vector<128x32xf32>,
    return
  }
  func.func @transform_0(%arg0: i32) -> (i32, i32) {
    %c0_i32 = arith.constant 0 : i32
    %c0_i32_0 = arith.constant 0 : i32
    return %arg0, %c0_i32 : i32, i32
  }
  func.func @transform_1(%arg0: i32) -> (i32, i32) {
    %c0_i32 = arith.constant 0 : i32
    %c0_i32_0 = arith.constant 0 : i32
    %c0_i32_1 = arith.constant 0 : i32
    return %c0_i32, %c0_i32_0 : i32, i32
  }
  func.func @transform_2(%arg0: i32) -> (i32, i32) {
    %c0_i32 = arith.constant 0 : i32
    %c0_i32_0 = arith.constant 0 : i32
    %c0_i32_1 = arith.constant 0 : i32
    return %c0_i32, %c0_i32_0 : i32, i32
  }
  func.func @transform_3(%arg0: i32) -> (i32, i32) {
    %c0_i32 = arith.constant 0 : i32
    %c0_i32_0 = arith.constant 0 : i32
    %c0_i32_1 = arith.constant 0 : i32
    return %c0_i32, %c0_i32_0 : i32, i32
  }
  func.func @transform_4(%arg0: i32) -> (i32, i32) {
    %c0_i32 = arith.constant 0 : i32
    %c0_i32_0 = arith.constant 0 : i32
    %c0_i32_1 = arith.constant 0 : i32
    return %c0_i32, %c0_i32_0 : i32, i32
  }
  func.func @transform_5(%arg0: i32) -> (i32, i32) {
    %c0_i32 = arith.constant 0 : i32
    %c0_i32_0 = arith.constant 0 : i32
    %c0_i32_1 = arith.constant 0 : i32
    return %c0_i32, %c0_i32_0 : i32, i32
  }
  func.func @transform_6(%arg0: i32) -> (i32, i32) {
    %c0_i32 = arith.constant 0 : i32
    %c0_i32_0 = arith.constant 0 : i32
    %c0_i32_1 = arith.constant 0 : i32
    return %c0_i32, %c0_i32_0 : i32, i32
  }
  func.func @transform_7(%arg0: i32) -> (i32, i32) {
    %c0_i32 = arith.constant 0 : i32
    %c0_i32_0 = arith.constant 0 : i32
    return %arg0, %c0_i32 : i32, i32
  }
}

</mosaic_0001>

<llo_original>
// kernel: fully_connected_nn.1
$region0: #{fully_connected_nn.1}
  #allocation0 [shape = 'u32[]', space=smem, size = 0x4, offset = 0x4, fixed_abs, tag = 'smem constant byte address 0x4 - core index']
  #allocation1 [shape = 'u32[144,128]{1,0:T(1,128)}', space=vmem, size = 0x12000, scoped, tag = 'internal scratch']
  %s0 = inlined_call_operand.vmem [shape: f32[250,16], index: 0, kind: input, shape index: {}]
  %s1 = inlined_call_operand.vmem [shape: bf16[16,128], index: 1, kind: input, shape index: {}]
  %s2 = inlined_call_operand.vmem [shape: f32[1,128], index: 2, kind: input, shape index: {}]
  %s3 = inlined_call_operand.vmem [shape: bf16[128,128], index: 3, kind: input, shape index: {}]
  %s4 = inlined_call_operand.vmem [shape: f32[1,128], index: 4, kind: input, shape index: {}]
  %s5 = inlined_call_operand.vmem [shape: bf16[128,32], index: 5, kind: input, shape index: {}]
  %s6 = inlined_call_operand.vmem [shape: f32[1,32], index: 6, kind: input, shape index: {}]
  %s7 = inlined_call_operand.vmem [shape: f32[250,32], index: 7, kind: output, shape index: {}]
  %s8 = sld [smem:[#allocation0]]
  $region61: #{fully_connected_nn.1} parent=0
    _
  %s10 = ssub.s32 1, %s8
  %s11 = scalar_select 0, %s10, %s8
  loop: start=0, step=1, limit=4
  $region2: #{fully_connected_nn.1} parent=0 // loop_pre_header
    _
  $region3: #{fully_connected_nn.1} parent=0 // loop_header
    %s13 = sphi 0, %s17
    %p14 = scmp.ge.s32.totalorder %s13, 4
    %s23 = sphi 0, %s25
    %s26 = sphi 0, %s23
    %s27 = sphi 0, %s26
    %s43 = sphi 0, %s27
    %s47 = sphi 0, %s47
    %s49 = sphi 0, %s47
    %s50 = sphi 0, %s49
    %s64 = sphi 0, %s50
    %s68 = sphi 0, %s68
    %s70 = sphi 0, %s68
    %s71 = sphi 0, %s70
    %s85 = sphi 0, %s71
    %s89 = sphi 0, %s89
    %s91 = sphi 0, %s89
    %s92 = sphi 0, %s91
    %s106 = sphi 0, %s92
    %s110 = sphi 0, %s110
    %s112 = sphi 0, %s110
    %s113 = sphi 0, %s112
    %s127 = sphi 0, %s113
    %s131 = sphi 0, %s131
    %s133 = sphi 0, %s131
    %s134 = sphi 0, %s133
    %s148 = sphi 0, %s134
    %s152 = sphi 0, %s152
    %s154 = sphi 0, %s152
    %s155 = sphi 0, %s154
    %s169 = sphi 0, %s155
    %s175 = sphi 0, %s177
    %s178 = sphi 0, %s175
    %s179 = sphi 0, %s178
    %s195 = sphi 0, %s179
  $region4: #{fully_connected_nn.1} parent=0 // loop_header_branch
    %16 = sbr.rel (%p14) target = $region8
  $region5: #{fully_connected_nn.1} parent=0 // loop_body
    %s18 = ssub.s32 %s13, 1
    %s19 = ssub.s32 %s13, 2
    %s20 = sadd.s32 %s13, 1
    %s21 = ssub.s32 %s13, %s20
    %p22 = scmp.eq.s32.totalorder %s21, 0
    %s24 = sadd.s32 %s23, 1
    %s25 = scalar_select %p22, %s23, %s24
    %p28 = pneg %p22
    %p29 = scmp.eq.s32.totalorder %s13, 1
    %p30 = por %p28, %p29
    %p31 = scmp.ne.s32.totalorder %s23, %s26
    %p32 = scmp.eq.s32.totalorder %s13, 0
    %p33 = por %p31, %p32
    %p34 = scmp.ne.s32.totalorder %s23, %s26
    %p35 = scmp.eq.s32.totalorder %s18, 1
    %p36 = por %p34, %p35
    %p37 = scmp.ne.s32.totalorder %s26, %s27
    %p38 = scmp.eq.s32.totalorder %s18, 0
    %p39 = por %p37, %p38
    %p40 = scmp.ne.s32.totalorder %s26, %s27
    %p41 = scmp.eq.s32.totalorder %s19, 1
    %p42 = por %p40, %p41
    %p44 = scmp.ne.s32.totalorder %s27, %s43
    %p45 = scmp.eq.s32.totalorder %s19, 0
    %p46 = por %p44, %p45
    %s48 = sadd.s32 %s47, 1
    %p51 = scmp.eq.s32.totalorder %s13, 1
    %p52 = scmp.ne.s32.totalorder %s47, %s49
    %p53 = scmp.eq.s32.totalorder %s13, 0
    %p54 = por %p52, %p53
    %p55 = scmp.ne.s32.totalorder %s47, %s49
    %p56 = scmp.eq.s32.totalorder %s18, 1
    %p57 = por %p55, %p56
    %p58 = scmp.ne.s32.totalorder %s49, %s50
    %p59 = scmp.eq.s32.totalorder %s18, 0
    %p60 = por %p58, %p59
    %p61 = scmp.ne.s32.totalorder %s49, %s50
    %p62 = scmp.eq.s32.totalorder %s19, 1
    %p63 = por %p61, %p62
    %p65 = scmp.ne.s32.totalorder %s50, %s64
    %p66 = scmp.eq.s32.totalorder %s19, 0
    %p67 = por %p65, %p66
    %s69 = sadd.s32 %s68, 1
    %p72 = scmp.eq.s32.totalorder %s13, 1
    %p73 = scmp.ne.s32.totalorder %s68, %s70
    %p74 = scmp.eq.s32.totalorder %s13, 0
    %p75 = por %p73, %p74
    %p76 = scmp.ne.s32.totalorder %s68, %s70
    %p77 = scmp.eq.s32.totalorder %s18, 1
    %p78 = por %p76, %p77
    %p79 = scmp.ne.s32.totalorder %s70, %s71
    %p80 = scmp.eq.s32.totalorder %s18, 0
    %p81 = por %p79, %p80
    %p82 = scmp.ne.s32.totalorder %s70, %s71
    %p83 = scmp.eq.s32.totalorder %s19, 1
    %p84 = por %p82, %p83
    %p86 = scmp.ne.s32.totalorder %s71, %s85
    %p87 = scmp.eq.s32.totalorder %s19, 0
    %p88 = por %p86, %p87
    %s90 = sadd.s32 %s89, 1
    %p93 = scmp.eq.s32.totalorder %s13, 1
    %p94 = scmp.ne.s32.totalorder %s89, %s91
    %p95 = scmp.eq.s32.totalorder %s13, 0
    %p96 = por %p94, %p95
    %p97 = scmp.ne.s32.totalorder %s89, %s91
    %p98 = scmp.eq.s32.totalorder %s18, 1
    %p99 = por %p97, %p98
    %p100 = scmp.ne.s32.totalorder %s91, %s92
    %p101 = scmp.eq.s32.totalorder %s18, 0
    %p102 = por %p100, %p101
    %p103 = scmp.ne.s32.totalorder %s91, %s92
    %p104 = scmp.eq.s32.totalorder %s19, 1
    %p105 = por %p103, %p104
    %p107 = scmp.ne.s32.totalorder %s92, %s106
    %p108 = scmp.eq.s32.totalorder %s19, 0
    %p109 = por %p107, %p108
    %s111 = sadd.s32 %s110, 1
    %p114 = scmp.eq.s32.totalorder %s13, 1
    %p115 = scmp.ne.s32.totalorder %s110, %s112
    %p116 = scmp.eq.s32.totalorder %s13, 0
    %p117 = por %p115, %p116
    %p118 = scmp.ne.s32.totalorder %s110, %s112
    %p119 = scmp.eq.s32.totalorder %s18, 1
    %p120 = por %p118, %p119
    %p121 = scmp.ne.s32.totalorder %s112, %s113
    %p122 = scmp.eq.s32.totalorder %s18, 0
    %p123 = por %p121, %p122
    %p124 = scmp.ne.s32.totalorder %s112, %s113
    %p125 = scmp.eq.s32.totalorder %s19, 1
    %p126 = por %p124, %p125
    %p128 = scmp.ne.s32.totalorder %s113, %s127
    %p129 = scmp.eq.s32.totalorder %s19, 0
    %p130 = por %p128, %p129
    %s132 = sadd.s32 %s131, 1
    %p135 = scmp.eq.s32.totalorder %s13, 1
    %p136 = scmp.ne.s32.totalorder %s131, %s133
    %p137 = scmp.eq.s32.totalorder %s13, 0
    %p138 = por %p136, %p137
    %p139 = scmp.ne.s32.totalorder %s131, %s133
    %p140 = scmp.eq.s32.totalorder %s18, 1
    %p141 = por %p139, %p140
    %p142 = scmp.ne.s32.totalorder %s133, %s134
    %p143 = scmp.eq.s32.totalorder %s18, 0
    %p144 = por %p142, %p143
    %p145 = scmp.ne.s32.totalorder %s133, %s134
    %p146 = scmp.eq.s32.totalorder %s19, 1
    %p147 = por %p145, %p146
    %p149 = scmp.ne.s32.totalorder %s134, %s148
    %p150 = scmp.eq.s32.totalorder %s19, 0
    %p151 = por %p149, %p150
    %s153 = sadd.s32 %s152, 1
    %p156 = scmp.eq.s32.totalorder %s13, 1
    %p157 = scmp.ne.s32.totalorder %s152, %s154
    %p158 = scmp.eq.s32.totalorder %s13, 0
    %p159 = por %p157, %p158
    %p160 = scmp.ne.s32.totalorder %s152, %s154
    %p161 = scmp.eq.s32.totalorder %s18, 1
    %p162 = por %p160, %p161
    %p163 = scmp.ne.s32.totalorder %s154, %s155
    %p164 = scmp.eq.s32.totalorder %s18, 0
    %p165 = por %p163, %p164
    %p166 = scmp.ne.s32.totalorder %s154, %s155
    %p167 = scmp.eq.s32.totalorder %s19, 1
    %p168 = por %p166, %p167
    %p170 = scmp.ne.s32.totalorder %s155, %s169
    %p171 = scmp.eq.s32.totalorder %s19, 0
    %p172 = por %p170, %p171
    %s173 = ssub.s32 %s13, %s20
    %p174 = scmp.eq.s32.totalorder %s173, 0
    %s176 = sadd.s32 %s175, 1
    %s177 = scalar_select %p174, %s175, %s176
    %p180 = pneg %p174
    %p181 = scmp.eq.s32.totalorder %s13, 1
    %p182 = por %p180, %p181
    %p183 = scmp.ne.s32.totalorder %s175, %s178
    %p184 = scmp.eq.s32.totalorder %s13, 0
    %p185 = por %p183, %p184
    %p186 = scmp.ne.s32.totalorder %s175, %s178
    %p187 = scmp.eq.s32.totalorder %s18, 1
    %p188 = por %p186, %p187
    %p189 = scmp.ne.s32.totalorder %s178, %s179
    %p190 = scmp.eq.s32.totalorder %s18, 0
    %p191 = por %p189, %p190
    %p192 = scmp.ne.s32.totalorder %s178, %s179
    %p193 = scmp.eq.s32.totalorder %s19, 1
    %p194 = por %p192, %p193
    %p196 = scmp.ne.s32.totalorder %s179, %s195
    %p197 = scmp.eq.s32.totalorder %s19, 0
    %p198 = por %p196, %p197
    %p199 = scmp.le.s32.totalorder 1, %s13
    %p200 = scmp.lt.s32.totalorder %s13, 3
    %p201 = pnand %p199, %p200
    %p202 = pneg %p201
    // Predicated region
    $region9: #{fully_connected_nn.1} parent=5 // pred_check
      _
    $region10: #{fully_connected_nn.1} parent=5 // pred_check_branch
      %204 = sbr.rel (%p201) target = $region12
    $region11: #{fully_connected_nn.1} parent=5 // pred_region
      %s205 = ssub.s32 %s13, 1
      // Predicated region
      $region13: #{fully_connected_nn.1} parent=11 // pred_check
        %p206 = pneg %p60
      $region14: #{fully_connected_nn.1} parent=11 // pred_check_branch
        %208 = sbr.rel (%p206) target = $region16
      $region15: #{fully_connected_nn.1} parent=11 // pred_region
        _
      $region16: #{fully_connected_nn.1} parent=11 // pred_fallthru
        _
      // Predicated region
      $region17: #{fully_connected_nn.1} parent=11 // pred_check
        %p209 = pneg %p81
      $region18: #{fully_connected_nn.1} parent=11 // pred_check_branch
        %211 = sbr.rel (%p209) target = $region20
      $region19: #{fully_connected_nn.1} parent=11 // pred_region
        _
      $region20: #{fully_connected_nn.1} parent=11 // pred_fallthru
        _
      // Predicated region
      $region21: #{fully_connected_nn.1} parent=11 // pred_check
        %p212 = pneg %p102
      $region22: #{fully_connected_nn.1} parent=11 // pred_check_branch
        %214 = sbr.rel (%p212) target = $region24
      $region23: #{fully_connected_nn.1} parent=11 // pred_region
        _
      $region24: #{fully_connected_nn.1} parent=11 // pred_fallthru
        _
      // Predicated region
      $region25: #{fully_connected_nn.1} parent=11 // pred_check
        %p215 = pneg %p123
      $region26: #{fully_connected_nn.1} parent=11 // pred_check_branch
        %217 = sbr.rel (%p215) target = $region28
      $region27: #{fully_connected_nn.1} parent=11 // pred_region
        _
      $region28: #{fully_connected_nn.1} parent=11 // pred_fallthru
        _
      // Predicated region
      $region29: #{fully_connected_nn.1} parent=11 // pred_check
        %p218 = pneg %p144
      $region30: #{fully_connected_nn.1} parent=11 // pred_check_branch
        %220 = sbr.rel (%p218) target = $region32
      $region31: #{fully_connected_nn.1} parent=11 // pred_region
        _
      $region32: #{fully_connected_nn.1} parent=11 // pred_fallthru
        _
      // Predicated region
      $region33: #{fully_connected_nn.1} parent=11 // pred_check
        %p221 = pneg %p165
      $region34: #{fully_connected_nn.1} parent=11 // pred_check_branch
        %223 = sbr.rel (%p221) target = $region36
      $region35: #{fully_connected_nn.1} parent=11 // pred_region
        _
      $region36: #{fully_connected_nn.1} parent=11 // pred_fallthru
        _
    $region12: #{fully_connected_nn.1} parent=5 // pred_fallthru
      _
    %p224 = scmp.lt.s32.totalorder %s13, 2
    // Predicated region
    $region37: #{fully_connected_nn.1} parent=5 // pred_check
      %p225 = pneg %p224
    $region38: #{fully_connected_nn.1} parent=5 // pred_check_branch
      %227 = sbr.rel (%p225) target = $region40
    $region39: #{fully_connected_nn.1} parent=5 // pred_region
      // Predicated region
      $region41: #{fully_connected_nn.1} parent=39 // pred_check
        %p228 = pneg %p33
      $region42: #{fully_connected_nn.1} parent=39 // pred_check_branch
        %230 = sbr.rel (%p228) target = $region44
      $region43: #{fully_connected_nn.1} parent=39 // pred_region
        %s231 = smul.u32 16, %s13
        %p232 = scmp.lt.s32.totalorder %s231, 31
        %s233 = scalar_select %p232, %s231, 31
        %s234 = smul.addr %s233, 8
        %s235 = scalar_lea.vmem %s0, %s234
        %s236 = smul.u32 16, %s13
      $region44: #{fully_connected_nn.1} parent=39 // pred_fallthru
        _
    $region40: #{fully_connected_nn.1} parent=5 // pred_fallthru
      _
    %p237 = scmp.le.s32.totalorder 1, %s13
    %p238 = scmp.lt.s32.totalorder %s13, 3
    %p239 = pnand %p237, %p238
    %p240 = pneg %p239
    // Predicated region
    $region45: #{fully_connected_nn.1} parent=5 // pred_check
      _
    $region46: #{fully_connected_nn.1} parent=5 // pred_check_branch
      %242 = sbr.rel (%p239) target = $region48
    $region47: #{fully_connected_nn.1} parent=5 // pred_region
      %s243 = ssub.s32 %s13, 1
      %s244 = smul.u32 16, %s18
      %p245 = scmp.lt.s32.totalorder %s244, 31
      %s246 = scalar_select %p245, %s244, 31
      %s247 = smul.addr %s246, 8
      %s248 = scalar_lea.vmem %s0, %s247
      %p249 = pneg %p39
      %p250 = pneg %p36
      %p251 = pneg %p60
      %p252 = pneg %p57
      %p253 = pneg %p81
      %p254 = pneg %p78
      %p255 = pneg %p102
      %p256 = pneg %p99
      %p257 = pneg %p123
      %p258 = pneg %p120
      %p259 = pneg %p144
      %p260 = pneg %p141
      %p261 = pneg %p165
      %p262 = pneg %p162
      %p263 = pneg %p191
      %p264 = pneg %p188
      %s265 = smul.u32 16, %s18
      %p266 = scmp.lt.s32.totalorder %s265, 31
      %s267 = scalar_select %p266, %s265, 31
      %s268 = smul.addr %s267, 8
      %s269 = scalar_lea.vmem %s7, %s268
      %s270 = smul.u32 16, %s18
      %p271 = scmp.lt.s32.totalorder %s270, 31
      %s272 = scalar_select %p271, %s270, 31
      %s273 = smul.addr %s272, 8
      %s274 = scalar_lea.vmem %s0, %s273
      %s275 = smul.u32 16, %s18
      %s276 = smul.u32 16, %s18
      %p277 = scmp.lt.s32.totalorder %s276, 31
      %s278 = scalar_select %p277, %s276, 31
      %s279 = smul.addr %s278, 8
      %s280 = scalar_lea.vmem %s7, %s279
      %s281 = smul.u32 16, %s18
      %v283 = vld [vmem:[%s274] sm:$0xff]
      %v284 = vld [vmem:[%s274 + $0x8] sm:$0xff]
      %v285 = vld [vmem:[%s274 + $0x10] sm:$0xff]
      %v286 = vld [vmem:[%s274 + $0x18] sm:$0xff]
      %v287 = vld [vmem:[%s274 + $0x20] sm:$0xff]
      %v288 = vld [vmem:[%s274 + $0x28] sm:$0xff]
      %v289 = vld [vmem:[%s274 + $0x30] sm:$0xff]
      %v290 = vld [vmem:[%s274 + $0x38] sm:$0xff]
      %v291 = vld [vmem:[%s274 + $0x40] sm:$0xff]
      %v292 = vld [vmem:[%s274 + $0x48] sm:$0xff]
      %v293 = vld [vmem:[%s274 + $0x50] sm:$0xff]
      %v294 = vld [vmem:[%s274 + $0x58] sm:$0xff]
      %v295 = vld [vmem:[%s274 + $0x60] sm:$0xff]
      %v296 = vld [vmem:[%s274 + $0x68] sm:$0xff]
      %v297 = vld [vmem:[%s274 + $0x70] sm:$0xff]
      %v298 = vld [vmem:[%s274 + $0x78] sm:$0xff]
      %v299 = vpack.c.bf16 %v284, %v283
      %v300 = vpack.c.bf16 %v286, %v285
      %v301 = vpack.c.bf16 %v288, %v287
      %v302 = vpack.c.bf16 %v290, %v289
      %v303 = vpack.c.bf16 %v292, %v291
      %v304 = vpack.c.bf16 %v294, %v293
      %v305 = vpack.c.bf16 %v296, %v295
      %v306 = vpack.c.bf16 %v298, %v297
      %v307 = vld [vmem:[%s1] sm:$0xf]
      %v308 = vld [vmem:[%s1 + $0x4] sm:$0xf]
      %v309 = vld [vmem:[%s2] sm:$0x1]
      %v311 = vlaneseq
      %v312 = vshrl.u32 %v311, 7
      %v313 = vsub.s32 0, %v312
      %v314 = vrot.slane %v309, %v313
      %v318 = vunpack.c.l.b16 %v307
      %v319 = vunpack.c.l.b16 %v308
      %v320 = vpack.c.b16 %v319, %v318
      %vm322 = vcmask 130048
      %v324 = vsel %vm322, %v299, 0
      %v327 = vsel %vm322, %v300, 0
      %v330 = vsel %vm322, %v301, 0
      %v333 = vsel %vm322, %v302, 0
      %v336 = vsel %vm322, %v303, 0
      %v339 = vsel %vm322, %v304, 0
      %v342 = vsel %vm322, %v305, 0
      %v345 = vsel %vm322, %v306, 0
      %347 = vmatprep.subr.bf16.mxu0 0
      %348 = vmatpush1.bf16.msra.mxu0 %v320
      %349 = vmatprep.subr.bf16.mxu0 0
      %350 = vmatpush1.bf16.msra.mxu0 0
      %351 = vmatprep.subr.bf16.mxu0 0
      %352 = vmatpush1.bf16.msra.mxu0 0
      %353 = vmatprep.subr.bf16.mxu0 0
      %354 = vmatpush1.bf16.msra.mxu0 0
      %355 = vmatprep.subr.bf16.mxu0 0
      %356 = vmatpush1.bf16.msra.mxu0 0
      %357 = vmatprep.subr.bf16.mxu0 0
      %358 = vmatpush1.bf16.msra.mxu0 0
      %359 = vmatprep.subr.bf16.mxu0 0
      %360 = vmatpush1.bf16.msra.mxu0 0
      %361 = vmatprep.subr.bf16.mxu0 0
      %362 = vmatpush1.bf16.msra.mxu0 0
      %363 = vmatprep.subr.bf16.mxu0 0
      %364 = vmatpush1.bf16.msra.mxu0 0
      %365 = vmatprep.subr.bf16.mxu0 0
      %366 = vmatpush1.bf16.msra.mxu0 0
      %367 = vmatprep.subr.bf16.mxu0 0
      %368 = vmatpush1.bf16.msra.mxu0 0
      %369 = vmatprep.subr.bf16.mxu0 0
      %370 = vmatpush1.bf16.msra.mxu0 0
      %371 = vmatprep.subr.bf16.mxu0 0
      %372 = vmatpush1.bf16.msra.mxu0 0
      %373 = vmatprep.subr.bf16.mxu0 0
      %374 = vmatpush1.bf16.msra.mxu0 0
      %375 = vmatprep.subr.bf16.mxu0 0
      %376 = vmatpush1.bf16.msra.mxu0 0
      %377 = vmatprep.subr.bf16.mxu0 0
      %378 = vmatpush1.bf16.msra.mxu0 0
      %379 = vmatprep.mubr.bf16.mxu0 0
      %380 = vmatmul.mubr.bf16.gmra.mrb[0].mxu0 %v324
      %v381 = vpop.f32.mrb[0].mxu0
      %v382 = vadd.f32 %v314, %v381
      %v383 = vpop.f32.mrb[0].mxu0
      %v384 = vpop.f32.mrb[0].mxu0
      %v385 = vadd.f32 %v314, %v384
      %v386 = vpop.f32.mrb[0].mxu0
      %387 = vmatprep.mubr.bf16.mxu0 0
      %388 = vmatmul.mubr.bf16.gmra.mrb[0].mxu0 %v327
      %v389 = vpop.f32.mrb[0].mxu0
      %v390 = vadd.f32 %v314, %v389
      %v391 = vpop.f32.mrb[0].mxu0
      %v392 = vpop.f32.mrb[0].mxu0
      %v393 = vadd.f32 %v314, %v392
      %v394 = vpop.f32.mrb[0].mxu0
      %395 = vmatprep.mubr.bf16.mxu0 0
      %396 = vmatmul.mubr.bf16.gmra.mrb[0].mxu0 %v330
      %v397 = vpop.f32.mrb[0].mxu0
      %v398 = vadd.f32 %v314, %v397
      %v399 = vpop.f32.mrb[0].mxu0
      %v400 = vpop.f32.mrb[0].mxu0
      %v401 = vadd.f32 %v314, %v400
      %v402 = vpop.f32.mrb[0].mxu0
      %403 = vmatprep.mubr.bf16.mxu0 0
      %404 = vmatmul.mubr.bf16.gmra.mrb[0].mxu0 %v333
      %v405 = vpop.f32.mrb[0].mxu0
      %v406 = vadd.f32 %v314, %v405
      %v407 = vpop.f32.mrb[0].mxu0
      %v408 = vpop.f32.mrb[0].mxu0
      %v409 = vadd.f32 %v314, %v408
      %v410 = vpop.f32.mrb[0].mxu0
      %411 = vmatprep.mubr.bf16.mxu0 0
      %412 = vmatmul.mubr.bf16.gmra.mrb[0].mxu0 %v336
      %v413 = vpop.f32.mrb[0].mxu0
      %v414 = vadd.f32 %v314, %v413
      %v415 = vpop.f32.mrb[0].mxu0
      %v416 = vpop.f32.mrb[0].mxu0
      %v417 = vadd.f32 %v314, %v416
      %v418 = vpop.f32.mrb[0].mxu0
      %419 = vmatprep.mubr.bf16.mxu0 0
      %420 = vmatmul.mubr.bf16.gmra.mrb[0].mxu0 %v339
      %v421 = vpop.f32.mrb[0].mxu0
      %v422 = vadd.f32 %v314, %v421
      %v423 = vpop.f32.mrb[0].mxu0
      %v424 = vpop.f32.mrb[0].mxu0
      %v425 = vadd.f32 %v314, %v424
      %v426 = vpop.f32.mrb[0].mxu0
      %427 = vmatprep.mubr.bf16.mxu0 0
      %428 = vmatmul.mubr.bf16.gmra.mrb[0].mxu0 %v342
      %v429 = vpop.f32.mrb[0].mxu0
      %v430 = vadd.f32 %v314, %v429
      %v431 = vpop.f32.mrb[0].mxu0
      %v432 = vpop.f32.mrb[0].mxu0
      %v433 = vadd.f32 %v314, %v432
      %v434 = vpop.f32.mrb[0].mxu0
      %435 = vmatprep.mubr.bf16.mxu0 0
      %436 = vmatmul.mubr.bf16.gmra.mrb[0].mxu0 %v345
      %v437 = vpop.f32.mrb[0].mxu0
      %v438 = vadd.f32 %v314, %v437
      %v439 = vpop.f32.mrb[0].mxu0
      %v440 = vpop.f32.mrb[0].mxu0
      %v441 = vadd.f32 %v314, %v440
      %v442 = vpop.f32.mrb[0].mxu0
      %443 = vdwg.mxu0
      %v444 = vpack.c.bf16 %v385, %v382
      %v445 = vpack.c.bf16 %v393, %v390
      %v446 = vpack.c.bf16 %v401, %v398
      %v447 = vpack.c.bf16 %v409, %v406
      %v448 = vpack.c.bf16 %v417, %v414
      %v449 = vpack.c.bf16 %v425, %v422
      %v450 = vpack.c.bf16 %v433, %v430
      %v451 = vpack.c.bf16 %v441, %v438
      %v452 = vld [vmem:[%s3] sm:$0xf]
      %v453 = vld [vmem:[%s3 + $0x4] sm:$0xf]
      %v454 = vld [vmem:[%s3 + $0x8] sm:$0xf]
      %v455 = vld [vmem:[%s3 + $0xc] sm:$0xf]
      %v456 = vld [vmem:[%s3 + $0x10] sm:$0xf]
      %v457 = vld [vmem:[%s3 + $0x14] sm:$0xf]
      %v458 = vld [vmem:[%s3 + $0x18] sm:$0xf]
      %v459 = vld [vmem:[%s3 + $0x1c] sm:$0xf]
      %v460 = vld [vmem:[%s3 + $0x20] sm:$0xf]
      %v461 = vld [vmem:[%s3 + $0x24] sm:$0xf]
      %v462 = vld [vmem:[%s3 + $0x28] sm:$0xf]
      %v463 = vld [vmem:[%s3 + $0x2c] sm:$0xf]
      %v464 = vld [vmem:[%s3 + $0x30] sm:$0xf]
      %v465 = vld [vmem:[%s3 + $0x34] sm:$0xf]
      %v466 = vld [vmem:[%s3 + $0x38] sm:$0xf]
      %v467 = vld [vmem:[%s3 + $0x3c] sm:$0xf]
      %v468 = vld [vmem:[%s4] sm:$0x1]
      %v470 = vlaneseq
      %v471 = vshrl.u32 %v470, 7
      %v472 = vsub.s32 0, %v471
      %v473 = vrot.slane %v468, %v472
      %v491 = vunpack.c.l.b16 %v452
      %v492 = vunpack.c.l.b16 %v453
      %v493 = vunpack.c.l.b16 %v454
      %v494 = vunpack.c.l.b16 %v455
      %v495 = vunpack.c.l.b16 %v456
      %v496 = vunpack.c.l.b16 %v457
      %v497 = vunpack.c.l.b16 %v458
      %v498 = vunpack.c.l.b16 %v459
      %v499 = vunpack.c.l.b16 %v460
      %v500 = vunpack.c.l.b16 %v461
      %v501 = vunpack.c.l.b16 %v462
      %v502 = vunpack.c.l.b16 %v463
      %v503 = vunpack.c.l.b16 %v464
      %v504 = vunpack.c.l.b16 %v465
      %v505 = vunpack.c.l.b16 %v466
      %v506 = vunpack.c.l.b16 %v467
      %v507 = vpack.c.b16 %v492, %v491
      %v508 = vpack.c.b16 %v494, %v493
      %v509 = vpack.c.b16 %v496, %v495
      %v510 = vpack.c.b16 %v498, %v497
      %v511 = vpack.c.b16 %v500, %v499
      %v512 = vpack.c.b16 %v502, %v501
      %v513 = vpack.c.b16 %v504, %v503
      %v514 = vpack.c.b16 %v506, %v505
      %523 = vmatprep.subr.bf16.mxu0 0
      %524 = vmatpush1.bf16.msra.mxu0 %v507
      %525 = vmatprep.subr.bf16.mxu0 0
      %526 = vmatpush1.bf16.msra.mxu0 %v508
      %527 = vmatprep.subr.bf16.mxu0 0
      %528 = vmatpush1.bf16.msra.mxu0 %v509
      %529 = vmatprep.subr.bf16.mxu0 0
      %530 = vmatpush1.bf16.msra.mxu0 %v510
      %531 = vmatprep.subr.bf16.mxu0 0
      %532 = vmatpush1.bf16.msra.mxu0 %v511
      %533 = vmatprep.subr.bf16.mxu0 0
      %534 = vmatpush1.bf16.msra.mxu0 %v512
      %535 = vmatprep.subr.bf16.mxu0 0
      %536 = vmatpush1.bf16.msra.mxu0 %v513
      %537 = vmatprep.subr.bf16.mxu0 0
      %538 = vmatpush1.bf16.msra.mxu0 %v514
      %539 = vmatprep.subr.bf16.mxu0 0
      %540 = vmatpush1.bf16.msra.mxu0 0
      %541 = vmatprep.subr.bf16.mxu0 0
      %542 = vmatpush1.bf16.msra.mxu0 0
      %543 = vmatprep.subr.bf16.mxu0 0
      %544 = vmatpush1.bf16.msra.mxu0 0
      %545 = vmatprep.subr.bf16.mxu0 0
      %546 = vmatpush1.bf16.msra.mxu0 0
      %547 = vmatprep.subr.bf16.mxu0 0
      %548 = vmatpush1.bf16.msra.mxu0 0
      %549 = vmatprep.subr.bf16.mxu0 0
      %550 = vmatpush1.bf16.msra.mxu0 0
      %551 = vmatprep.subr.bf16.mxu0 0
      %552 = vmatpush1.bf16.msra.mxu0 0
      %553 = vmatprep.subr.bf16.mxu0 0
      %554 = vmatpush1.bf16.msra.mxu0 0
      %555 = vmatprep.mubr.bf16.mxu0 0
      %556 = vmatmul.mubr.bf16.gmra.mrb[0].mxu0 %v444
      %v557 = vpop.f32.mrb[0].mxu0
      %v558 = vadd.f32 %v473, %v557
      %v559 = vpop.f32.mrb[0].mxu0
      %v560 = vpop.f32.mrb[0].mxu0
      %v561 = vadd.f32 %v473, %v560
      %v562 = vpop.f32.mrb[0].mxu0
      %563 = vmatprep.mubr.bf16.mxu0 0
      %564 = vmatmul.mubr.bf16.gmra.mrb[0].mxu0 %v445
      %v565 = vpop.f32.mrb[0].mxu0
      %v566 = vadd.f32 %v473, %v565
      %v567 = vpop.f32.mrb[0].mxu0
      %v568 = vpop.f32.mrb[0].mxu0
      %v569 = vadd.f32 %v473, %v568
      %v570 = vpop.f32.mrb[0].mxu0
      %571 = vmatprep.mubr.bf16.mxu0 0
      %572 = vmatmul.mubr.bf16.gmra.mrb[0].mxu0 %v446
      %v573 = vpop.f32.mrb[0].mxu0
      %v574 = vadd.f32 %v473, %v573
      %v575 = vpop.f32.mrb[0].mxu0
      %v576 = vpop.f32.mrb[0].mxu0
      %v577 = vadd.f32 %v473, %v576
      %v578 = vpop.f32.mrb[0].mxu0
      %579 = vmatprep.mubr.bf16.mxu0 0
      %580 = vmatmul.mubr.bf16.gmra.mrb[0].mxu0 %v447
      %v581 = vpop.f32.mrb[0].mxu0
      %v582 = vadd.f32 %v473, %v581
      %v583 = vpop.f32.mrb[0].mxu0
      %v584 = vpop.f32.mrb[0].mxu0
      %v585 = vadd.f32 %v473, %v584
      %v586 = vpop.f32.mrb[0].mxu0
      %587 = vmatprep.mubr.bf16.mxu0 0
      %588 = vmatmul.mubr.bf16.gmra.mrb[0].mxu0 %v448
      %v589 = vpop.f32.mrb[0].mxu0
      %v590 = vadd.f32 %v473, %v589
      %v591 = vpop.f32.mrb[0].mxu0
      %v592 = vpop.f32.mrb[0].mxu0
      %v593 = vadd.f32 %v473, %v592
      %v594 = vpop.f32.mrb[0].mxu0
      %595 = vmatprep.mubr.bf16.mxu0 0
      %596 = vmatmul.mubr.bf16.gmra.mrb[0].mxu0 %v449
      %v597 = vpop.f32.mrb[0].mxu0
      %v598 = vadd.f32 %v473, %v597
      %v599 = vpop.f32.mrb[0].mxu0
      %v600 = vpop.f32.mrb[0].mxu0
      %v601 = vadd.f32 %v473, %v600
      %v602 = vpop.f32.mrb[0].mxu0
      %603 = vmatprep.mubr.bf16.mxu0 0
      %604 = vmatmul.mubr.bf16.gmra.mrb[0].mxu0 %v450
      %v605 = vpop.f32.mrb[0].mxu0
      %v606 = vadd.f32 %v473, %v605
      %v607 = vpop.f32.mrb[0].mxu0
      %v608 = vpop.f32.mrb[0].mxu0
      %v609 = vadd.f32 %v473, %v608
      %v610 = vpop.f32.mrb[0].mxu0
      %611 = vmatprep.mubr.bf16.mxu0 0
      %612 = vmatmul.mubr.bf16.gmra.mrb[0].mxu0 %v451
      %v613 = vpop.f32.mrb[0].mxu0
      %v614 = vadd.f32 %v473, %v613
      %v615 = vpop.f32.mrb[0].mxu0
      %v616 = vpop.f32.mrb[0].mxu0
      %v617 = vadd.f32 %v473, %v616
      %v618 = vpop.f32.mrb[0].mxu0
      %619 = vdwg.mxu0
      %v620 = vmax.f32 %v558, 0.0
      %v621 = vmax.f32 %v561, 0.0
      %v622 = vmax.f32 %v566, 0.0
      %v623 = vmax.f32 %v569, 0.0
      %v624 = vmax.f32 %v574, 0.0
      %v625 = vmax.f32 %v577, 0.0
      %v626 = vmax.f32 %v582, 0.0
      %v627 = vmax.f32 %v585, 0.0
      %v628 = vmax.f32 %v590, 0.0
      %v629 = vmax.f32 %v593, 0.0
      %v630 = vmax.f32 %v598, 0.0
      %v631 = vmax.f32 %v601, 0.0
      %v632 = vmax.f32 %v606, 0.0
      %v633 = vmax.f32 %v609, 0.0
      %v634 = vmax.f32 %v614, 0.0
      %v635 = vmax.f32 %v617, 0.0
      %v636 = vpack.c.bf16 %v621, %v620
      %v637 = vpack.c.bf16 %v623, %v622
      %v638 = vpack.c.bf16 %v625, %v624
      %v639 = vpack.c.bf16 %v627, %v626
      %v640 = vpack.c.bf16 %v629, %v628
      %v641 = vpack.c.bf16 %v631, %v630
      %v642 = vpack.c.bf16 %v633, %v632
      %v643 = vpack.c.bf16 %v635, %v634
      %v644 = vld [vmem:[%s5] sm:$0xf]
      %v645 = vld [vmem:[%s5 + $0x4] sm:$0xf]
      %v646 = vld [vmem:[%s5 + $0x8] sm:$0xf]
      %v647 = vld [vmem:[%s5 + $0xc] sm:$0xf]
      %v648 = vld [vmem:[%s5 + $0x10] sm:$0xf]
      %v649 = vld [vmem:[%s5 + $0x14] sm:$0xf]
      %v650 = vld [vmem:[%s5 + $0x18] sm:$0xf]
      %v651 = vld [vmem:[%s5 + $0x1c] sm:$0xf]
      %v652 = vld [vmem:[%s5 + $0x20] sm:$0xf]
      %v653 = vld [vmem:[%s5 + $0x24] sm:$0xf]
      %v654 = vld [vmem:[%s5 + $0x28] sm:$0xf]
      %v655 = vld [vmem:[%s5 + $0x2c] sm:$0xf]
      %v656 = vld [vmem:[%s5 + $0x30] sm:$0xf]
      %v657 = vld [vmem:[%s5 + $0x34] sm:$0xf]
      %v658 = vld [vmem:[%s5 + $0x38] sm:$0xf]
      %v659 = vld [vmem:[%s5 + $0x3c] sm:$0xf]
      %v660 = vld [vmem:[%s6] sm:$0x1]
      %v662 = vlaneseq
      %v663 = vshrl.u32 %v662, 7
      %v664 = vsub.s32 0, %v663
      %v665 = vrot.slane %v660, %v664
      %v683 = vunpack.c.l.b16 %v644
      %v684 = vunpack.c.l.b16 %v645
      %v685 = vunpack.c.l.b16 %v646
      %v686 = vunpack.c.l.b16 %v647
      %v687 = vunpack.c.l.b16 %v648
      %v688 = vunpack.c.l.b16 %v649
      %v689 = vunpack.c.l.b16 %v650
      %v690 = vunpack.c.l.b16 %v651
      %v691 = vunpack.c.l.b16 %v652
      %v692 = vunpack.c.l.b16 %v653
      %v693 = vunpack.c.l.b16 %v654
      %v694 = vunpack.c.l.b16 %v655
      %v695 = vunpack.c.l.b16 %v656
      %v696 = vunpack.c.l.b16 %v657
      %v697 = vunpack.c.l.b16 %v658
      %v698 = vunpack.c.l.b16 %v659
      %v699 = vpack.c.b16 %v684, %v683
      %v700 = vpack.c.b16 %v686, %v685
      %v701 = vpack.c.b16 %v688, %v687
      %v702 = vpack.c.b16 %v690, %v689
      %v703 = vpack.c.b16 %v692, %v691
      %v704 = vpack.c.b16 %v694, %v693
      %v705 = vpack.c.b16 %v696, %v695
      %v706 = vpack.c.b16 %v698, %v697
      %715 = vmatprep.subr.bf16.mxu0 0
      %716 = vmatpush1.bf16.msra.mxu0 %v699
      %717 = vmatprep.subr.bf16.mxu0 0
      %718 = vmatpush1.bf16.msra.mxu0 %v700
      %719 = vmatprep.subr.bf16.mxu0 0
      %720 = vmatpush1.bf16.msra.mxu0 %v701
      %721 = vmatprep.subr.bf16.mxu0 0
      %722 = vmatpush1.bf16.msra.mxu0 %v702
      %723 = vmatprep.subr.bf16.mxu0 0
      %724 = vmatpush1.bf16.msra.mxu0 %v703
      %725 = vmatprep.subr.bf16.mxu0 0
      %726 = vmatpush1.bf16.msra.mxu0 %v704
      %727 = vmatprep.subr.bf16.mxu0 0
      %728 = vmatpush1.bf16.msra.mxu0 %v705
      %729 = vmatprep.subr.bf16.mxu0 0
      %730 = vmatpush1.bf16.msra.mxu0 %v706
      %731 = vmatprep.subr.bf16.mxu0 0
      %732 = vmatpush1.bf16.msra.mxu0 0
      %733 = vmatprep.subr.bf16.mxu0 0
      %734 = vmatpush1.bf16.msra.mxu0 0
      %735 = vmatprep.subr.bf16.mxu0 0
      %736 = vmatpush1.bf16.msra.mxu0 0
      %737 = vmatprep.subr.bf16.mxu0 0
      %738 = vmatpush1.bf16.msra.mxu0 0
      %739 = vmatprep.subr.bf16.mxu0 0
      %740 = vmatpush1.bf16.msra.mxu0 0
      %741 = vmatprep.subr.bf16.mxu0 0
      %742 = vmatpush1.bf16.msra.mxu0 0
      %743 = vmatprep.subr.bf16.mxu0 0
      %744 = vmatpush1.bf16.msra.mxu0 0
      %745 = vmatprep.subr.bf16.mxu0 0
      %746 = vmatpush1.bf16.msra.mxu0 0
      %747 = vmatprep.mubr.bf16.mxu0 0
      %748 = vmatmul.mubr.bf16.gmra.mrb[0].mxu0 %v636
      %v749 = vpop.f32.mrb[0].mxu0
      %v750 = vadd.f32 %v665, %v749
      %v751 = vpop.f32.mrb[0].mxu0
      %v752 = vpop.f32.mrb[0].mxu0
      %v753 = vadd.f32 %v665, %v752
      %v754 = vpop.f32.mrb[0].mxu0
      %755 = vmatprep.mubr.bf16.mxu0 0
      %756 = vmatmul.mubr.bf16.gmra.mrb[0].mxu0 %v637
      %v757 = vpop.f32.mrb[0].mxu0
      %v758 = vadd.f32 %v665, %v757
      %v759 = vpop.f32.mrb[0].mxu0
      %v760 = vpop.f32.mrb[0].mxu0
      %v761 = vadd.f32 %v665, %v760
      %v762 = vpop.f32.mrb[0].mxu0
      %763 = vmatprep.mubr.bf16.mxu0 0
      %764 = vmatmul.mubr.bf16.gmra.mrb[0].mxu0 %v638
      %v765 = vpop.f32.mrb[0].mxu0
      %v766 = vadd.f32 %v665, %v765
      %v767 = vpop.f32.mrb[0].mxu0
      %v768 = vpop.f32.mrb[0].mxu0
      %v769 = vadd.f32 %v665, %v768
      %v770 = vpop.f32.mrb[0].mxu0
      %771 = vmatprep.mubr.bf16.mxu0 0
      %772 = vmatmul.mubr.bf16.gmra.mrb[0].mxu0 %v639
      %v773 = vpop.f32.mrb[0].mxu0
      %v774 = vadd.f32 %v665, %v773
      %v775 = vpop.f32.mrb[0].mxu0
      %v776 = vpop.f32.mrb[0].mxu0
      %v777 = vadd.f32 %v665, %v776
      %v778 = vpop.f32.mrb[0].mxu0
      %779 = vmatprep.mubr.bf16.mxu0 0
      %780 = vmatmul.mubr.bf16.gmra.mrb[0].mxu0 %v640
      %v781 = vpop.f32.mrb[0].mxu0
      %v782 = vadd.f32 %v665, %v781
      %v783 = vpop.f32.mrb[0].mxu0
      %v784 = vpop.f32.mrb[0].mxu0
      %v785 = vadd.f32 %v665, %v784
      %v786 = vpop.f32.mrb[0].mxu0
      %787 = vmatprep.mubr.bf16.mxu0 0
      %788 = vmatmul.mubr.bf16.gmra.mrb[0].mxu0 %v641
      %v789 = vpop.f32.mrb[0].mxu0
      %v790 = vadd.f32 %v665, %v789
      %v791 = vpop.f32.mrb[0].mxu0
      %v792 = vpop.f32.mrb[0].mxu0
      %v793 = vadd.f32 %v665, %v792
      %v794 = vpop.f32.mrb[0].mxu0
      %795 = vmatprep.mubr.bf16.mxu0 0
      %796 = vmatmul.mubr.bf16.gmra.mrb[0].mxu0 %v642
      %v797 = vpop.f32.mrb[0].mxu0
      %v798 = vadd.f32 %v665, %v797
      %v799 = vpop.f32.mrb[0].mxu0
      %v800 = vpop.f32.mrb[0].mxu0
      %v801 = vadd.f32 %v665, %v800
      %v802 = vpop.f32.mrb[0].mxu0
      %803 = vmatprep.mubr.bf16.mxu0 0
      %804 = vmatmul.mubr.bf16.gmra.mrb[0].mxu0 %v643
      %v805 = vpop.f32.mrb[0].mxu0
      %v806 = vadd.f32 %v665, %v805
      %v807 = vpop.f32.mrb[0].mxu0
      %v808 = vpop.f32.mrb[0].mxu0
      %v809 = vadd.f32 %v665, %v808
      %v810 = vpop.f32.mrb[0].mxu0
      %811 = vdwg.mxu0
      %vm812 = vcmask 261120
      %813 = vst.msk [vmem:[%s280] sm:$0xff] %vm812, %v750
      %814 = vst.msk [vmem:[%s280 + $0x8] sm:$0xff] %vm812, %v753
      %815 = vst.msk [vmem:[%s280 + $0x10] sm:$0xff] %vm812, %v758
      %816 = vst.msk [vmem:[%s280 + $0x18] sm:$0xff] %vm812, %v761
      %817 = vst.msk [vmem:[%s280 + $0x20] sm:$0xff] %vm812, %v766
      %818 = vst.msk [vmem:[%s280 + $0x28] sm:$0xff] %vm812, %v769
      %819 = vst.msk [vmem:[%s280 + $0x30] sm:$0xff] %vm812, %v774
      %820 = vst.msk [vmem:[%s280 + $0x38] sm:$0xff] %vm812, %v777
      %821 = vst.msk [vmem:[%s280 + $0x40] sm:$0xff] %vm812, %v782
      %822 = vst.msk [vmem:[%s280 + $0x48] sm:$0xff] %vm812, %v785
      %823 = vst.msk [vmem:[%s280 + $0x50] sm:$0xff] %vm812, %v790
      %824 = vst.msk [vmem:[%s280 + $0x58] sm:$0xff] %vm812, %v793
      %825 = vst.msk [vmem:[%s280 + $0x60] sm:$0xff] %vm812, %v798
      %826 = vst.msk [vmem:[%s280 + $0x68] sm:$0xff] %vm812, %v801
      %827 = vst.msk [vmem:[%s280 + $0x70] sm:$0xff] %vm812, %v806
      %828 = vst.msk [vmem:[%s280 + $0x78] sm:$0xff] %vm812, %v809
      %s829 = smul.u32 16, %s18
      %p830 = scmp.lt.s32.totalorder %s829, 31
      %s831 = scalar_select %p830, %s829, 31
      %s832 = smul.addr %s831, 8
      %s833 = scalar_lea.vmem %s7, %s832
      // Predicated region
      $region49: #{fully_connected_nn.1} parent=47 // pred_check
        %p834 = pneg %p188
      $region50: #{fully_connected_nn.1} parent=47 // pred_check_branch
        %836 = sbr.rel (%p834) target = $region52
      $region51: #{fully_connected_nn.1} parent=47 // pred_region
        %s837 = smul.u32 16, %s18
      $region52: #{fully_connected_nn.1} parent=47 // pred_fallthru
        _
    $region48: #{fully_connected_nn.1} parent=5 // pred_fallthru
      _
    %p838 = scmp.le.s32.totalorder 2, %s13
    // Predicated region
    $region53: #{fully_connected_nn.1} parent=5 // pred_check
      %p839 = pneg %p838
    $region54: #{fully_connected_nn.1} parent=5 // pred_check_branch
      %841 = sbr.rel (%p839) target = $region56
    $region55: #{fully_connected_nn.1} parent=5 // pred_region
      %s842 = ssub.s32 %s13, 2
      // Predicated region
      $region57: #{fully_connected_nn.1} parent=55 // pred_check
        %p843 = pneg %p194
      $region58: #{fully_connected_nn.1} parent=55 // pred_check_branch
        %845 = sbr.rel (%p843) target = $region60
      $region59: #{fully_connected_nn.1} parent=55 // pred_region
        %s846 = smul.u32 16, %s19
        %p847 = scmp.lt.s32.totalorder %s846, 31
        %s848 = scalar_select %p847, %s846, 31
        %s849 = smul.addr %s848, 8
        %s850 = scalar_lea.vmem %s7, %s849
      $region60: #{fully_connected_nn.1} parent=55 // pred_fallthru
        _
    $region56: #{fully_connected_nn.1} parent=5 // pred_fallthru
      _
  $region6: #{fully_connected_nn.1} parent=0 // loop_footer
    %s17 = sadd.s32 1, %s13
  $region7: #{fully_connected_nn.1} parent=0 // loop_footer_branch
    %12 = sbr.rel target = $region3
  $region8: #{fully_connected_nn.1} parent=0 // loop_exit
    _

</llo_original>
